<compile_context>
chip_gen: v5e
topology: v5e:2x2
jax: 0.10.0
libtpu: 0.0.40
codegen_flags: <defaults>
</compile_context>

<pallas_src>
import functools

import jax
import jax.numpy as jnp
from jax.experimental import pallas as pl
from jax.experimental.pallas import tpu as pltpu


def _bn_pad_kernel(scale_ref, shift_ref, x_ref, o_ref, *, pad, H, W):
    # scale_ref / shift_ref: (CT, 1, 1) f32 in VMEM
    # x_ref: (CT, H, W); o_ref: (CT, H + 2*pad, W + 2*pad)
    scale = scale_ref[...]                                   # (CT, 1, 1)
    shift = shift_ref[...]                                   # (CT, 1, 1)
    y = (x_ref[...].astype(jnp.float32) * scale + shift).astype(o_ref.dtype)

    if pad > 0:
        # Aligned full-tile fill with the per-channel border value (== BN(0)),
        # then one interior overwrite at the static (pad, pad) offset.
        border = jnp.broadcast_to(shift, o_ref.shape).astype(o_ref.dtype)
        o_ref[...] = border
        o_ref[:, pad:pad + H, pad:pad + W] = y
    else:
        o_ref[...] = y


def _round_up(a, b):
    return (a + b - 1) // b * b


def _pick_block_channels(NC, H, W, Hp, Wp, dtype):
    """Largest divisor of NC whose double-buffered VMEM footprint fits the budget."""
    itemsize = jnp.dtype(dtype).itemsize
    sublane = {4: 8, 2: 16, 1: 32}.get(itemsize, 8)
    # (8, 128)-padded VMEM bytes per (n, c) image:
    in_bytes = _round_up(H, sublane) * _round_up(W, 128) * itemsize
    out_bytes = _round_up(Hp, sublane) * _round_up(Wp, 128) * itemsize
    par_bytes = 2 * 8 * 128 * 4        # worst-case layout padding for the two (CT,1,1) f32 blocks
    per_ch = in_bytes + out_bytes + par_bytes

    try:
        vmem = pltpu.get_tpu_info().vmem_capacity_bytes
    except Exception:
        vmem = 64 * 1024 * 1024
    # Stay well under the scoped-VMEM default (32 MiB) on every generation, with
    # double-buffering of every operand accounted for explicitly (2x below).
    budget = min(vmem // 8, 12 * 1024 * 1024)
    cap = max(1, budget // (2 * per_ch))

    ct = 1
    for d in range(1, NC + 1):
        if NC % d == 0 and d <= cap:
            ct = d
    # Keep at least 2 evenly-sized grid steps when possible (megacore / 2 TCs on v7x).
    if NC // ct < 2:
        best = None
        for d in range(1, NC + 1):
            if NC % d == 0 and d <= cap and NC // d >= 2:
                best = d
        if best is not None:
            ct = best
    return ct


def bn_and_pad(x, weight, bias, running_mean, running_var, *, pad_pixels, eps=1e-5):
    """Inference-mode BNAndPadLayer forward.  x: (N, C, H, W) -> (N, C, H+2p, W+2p)."""
    # TODO(synk): training-mode BN (batch statistics + running-stat momentum update)
    # is not implemented; this is the eval-mode forward of the module.
    N, C, H, W = x.shape
    p = int(pad_pixels)
    Hp, Wp = H + 2 * p, W + 2 * p

    inv_std = jax.lax.rsqrt(running_var.astype(jnp.float32) + eps)
    if weight is not None:
        scale = weight.astype(jnp.float32) * inv_std
    else:
        scale = inv_std
    if bias is not None:
        shift = bias.astype(jnp.float32) - running_mean.astype(jnp.float32) * scale
    else:
        shift = -running_mean.astype(jnp.float32) * scale

    NC = N * C
    x2 = x.reshape(NC, H, W)                              # free reshape (contiguous)
    scale_nc = jnp.tile(scale, N).reshape(NC, 1, 1)       # per-(n,c) scale
    shift_nc = jnp.tile(shift, N).reshape(NC, 1, 1)       # per-(n,c) shift (== pad value)

    CT = _pick_block_channels(NC, H, W, Hp, Wp, x.dtype)
    grid = (NC // CT,)

    itemsize = jnp.dtype(x.dtype).itemsize
    cost = pl.CostEstimate(
        flops=2 * NC * H * W,
        transcendentals=0,
        bytes_accessed=NC * H * W * itemsize + NC * Hp * Wp * itemsize + 2 * NC * 4,
    )

    kernel = functools.partial(_bn_pad_kernel, pad=p, H=H, W=W)
    out_flat = pl.pallas_call(
        kernel,
        out_shape=jax.ShapeDtypeStruct((NC, Hp, Wp), x.dtype),
        grid=grid,
        in_specs=[
            pl.BlockSpec((CT, 1, 1), lambda i: (i, 0, 0)),   # scale
            pl.BlockSpec((CT, 1, 1), lambda i: (i, 0, 0)),   # shift
            pl.BlockSpec((CT, H, W), lambda i: (i, 0, 0)),   # x block
        ],
        out_specs=pl.BlockSpec((CT, Hp, Wp), lambda i: (i, 0, 0)),
        compiler_params=pltpu.CompilerParams(
            dimension_semantics=("parallel",),
            vmem_limit_bytes=32 * 1024 * 1024,
        ),
        cost_estimate=cost,
    )(scale_nc, shift_nc, x2)

    return out_flat.reshape(N, C, Hp, Wp)                 # free reshape (contiguous)


def _reference(x, weight, bias, running_mean, running_var, *, pad_pixels, eps=1e-5):
    inv_std = 1.0 / jnp.sqrt(running_var + eps)
    y = (x - running_mean[None, :, None, None]) * inv_std[None, :, None, None]
    y = y * weight[None, :, None, None] + bias[None, :, None, None]
    if pad_pixels > 0:
        pad_val = bias - running_mean * weight * inv_std
        y = jnp.pad(y, ((0, 0), (0, 0), (pad_pixels,) * 2, (pad_pixels,) * 2))
        pv = pad_val[None, :, None, None]
        pp = pad_pixels
        y = y.at[:, :, 0:pp, :].set(pv)
        y = y.at[:, :, -pp:, :].set(pv)
        y = y.at[:, :, :, 0:pp].set(pv)
        y = y.at[:, :, :, -pp:].set(pv)
    return y


if __name__ == "__main__":
    key = jax.random.PRNGKey(0)
    kx, kw, kb, km, kv = jax.random.split(key, 5)

    N, C, H, W = 2, 4, 16, 16
    pad_pixels = 1
    eps = 1e-5

    x = jax.random.normal(kx, (N, C, H, W), dtype=jnp.float32)
    weight = 1.0 + 0.1 * jax.random.normal(kw, (C,), dtype=jnp.float32)
    bias = 0.1 * jax.random.normal(kb, (C,), dtype=jnp.float32)
    running_mean = 0.05 * jax.random.normal(km, (C,), dtype=jnp.float32)
    running_var = 0.5 + jax.random.uniform(kv, (C,), dtype=jnp.float32)

    out = bn_and_pad(x, weight, bias, running_mean, running_var,
                     pad_pixels=pad_pixels, eps=eps)
    out = jax.block_until_ready(out)

    ref = _reference(x, weight, bias, running_mean, running_var,
                     pad_pixels=pad_pixels, eps=eps)
    assert out.shape == (N, C, H + 2 * pad_pixels, W + 2 * pad_pixels)
    assert jnp.allclose(out, ref, atol=1e-5, rtol=1e-5)

    print("KERNEL_OK")
</pallas_src>

<mosaic_0001>
module attributes {stable_mosaic.version = 11 : i64} {
  func.func @_bn_pad_kernel(%arg0: i32, %arg1: memref<4x1x1xf32, #tpu.memory_space<vmem>>, %arg2: memref<4x1x1xf32, #tpu.memory_space<vmem>>, %arg3: memref<4x16x16xf32, #tpu.memory_space<vmem>>, %arg4: memref<4x18x18xf32, #tpu.memory_space<vmem>>) attributes {dimension_semantics = [#tpu.dimension_semantics<parallel>], iteration_bounds = array<i64: 2>, scalar_prefetch = 0 : i64, scratch_operands = 0 : i64, tpu.core_type = #tpu.core_type<tc>, window_params = [{transform_indices = @transform_0, window_bounds = array<i64: 4, 1, 1>}, {transform_indices = @transform_1, window_bounds = array<i64: 4, 1, 1>}, {transform_indices = @transform_2, window_bounds = array<i64: 4, 16, 16>}, {transform_indices = @transform_3, window_bounds = array<i64: 4, 18, 18>}]} {
    %c0 = arith.constant 0 : index
    %c0_0 = arith.constant 0 : index
    %c0_1 = arith.constant 0 : index
    %0 = vector.load %arg1[%c0, %c0_0, %c0_1] : memref<4x1x1xf32, #tpu.memory_space<vmem>>, vector<4x1x1xf32>
    %c0_2 = arith.constant 0 : index
    %c0_3 = arith.constant 0 : index
    %c0_4 = arith.constant 0 : index
    %1 = vector.load %arg2[%c0_2, %c0_3, %c0_4] : memref<4x1x1xf32, #tpu.memory_space<vmem>>, vector<4x1x1xf32>
    %c0_5 = arith.constant 0 : index
    %c0_6 = arith.constant 0 : index
    %c0_7 = arith.constant 0 : index
    %2 = vector.load %arg3[%c0_5, %c0_6, %c0_7] : memref<4x16x16xf32, #tpu.memory_space<vmem>>, vector<4x16x16xf32>
    %3 = vector.broadcast %0 : vector<4x1x1xf32> to vector<4x16x16xf32>
    %4 = arith.mulf %2, %3 : vector<4x16x16xf32>
    %5 = vector.broadcast %1 : vector<4x1x1xf32> to vector<4x16x16xf32>
    %6 = arith.addf %4, %5 : vector<4x16x16xf32>
    %7 = vector.shape_cast %1 : vector<4x1x1xf32> to vector<4x1x1xf32>
    %8 = vector.broadcast %7 : vector<4x1x1xf32> to vector<4x18x18xf32>
    %c0_8 = arith.constant 0 : index
    %c0_9 = arith.constant 0 : index
    %c0_10 = arith.constant 0 : index
    %9 = vector.load %arg4[%c0_8, %c0_9, %c0_10] : memref<4x18x18xf32, #tpu.memory_space<vmem>>, vector<4x18x18xf32>
    tpu.vector_store %arg4[%c0_8, %c0_9, %c0_10], %8 {strides = array<i32>} : memref<4x18x18xf32, #tpu.memory_space<vmem>>, vector<4x18x18xf32>,
    %c0_11 = arith.constant 0 : index
    %c1 = arith.constant 1 : index
    %c1_12 = arith.constant 1 : index
    %10 = vector.load %arg4[%c0_11, %c1, %c1_12] : memref<4x18x18xf32, #tpu.memory_space<vmem>>, vector<4x16x16xf32>
    tpu.vector_store %arg4[%c0_11, %c1, %c1_12], %6 {strides = array<i32>} : memref<4x18x18xf32, #tpu.memory_space<vmem>>, vector<4x16x16xf32>,
    return
  }
  func.func @transform_0(%arg0: i32) -> (i32, i32, i32) {
    %c0_i32 = arith.constant 0 : i32
    %c0_i32_0 = arith.constant 0 : i32
    %c0_i32_1 = arith.constant 0 : i32
    return %arg0, %c0_i32, %c0_i32_0 : i32, i32, i32
  }
  func.func @transform_1(%arg0: i32) -> (i32, i32, i32) {
    %c0_i32 = arith.constant 0 : i32
    %c0_i32_0 = arith.constant 0 : i32
    %c0_i32_1 = arith.constant 0 : i32
    return %arg0, %c0_i32, %c0_i32_0 : i32, i32, i32
  }
  func.func @transform_2(%arg0: i32) -> (i32, i32, i32) {
    %c0_i32 = arith.constant 0 : i32
    %c0_i32_0 = arith.constant 0 : i32
    %c0_i32_1 = arith.constant 0 : i32
    return %arg0, %c0_i32, %c0_i32_0 : i32, i32, i32
  }
  func.func @transform_3(%arg0: i32) -> (i32, i32, i32) {
    %c0_i32 = arith.constant 0 : i32
    %c0_i32_0 = arith.constant 0 : i32
    %c0_i32_1 = arith.constant 0 : i32
    return %arg0, %c0_i32, %c0_i32_0 : i32, i32, i32
  }
}

</mosaic_0001>

<llo_original>
// kernel: tpu_custom_call.1
$region0: #{tpu_custom_call.1}
  #allocation0 [shape = 'u32[]', space=smem, size = 0x4, offset = 0x4, fixed_abs, tag = 'smem constant byte address 0x4 - core index']
  #allocation1 [shape = 'u32[72,128]{1,0:T(1,128)}', space=vmem, size = 0x9000, scoped, tag = 'internal scratch']
  %s0 = inlined_call_operand.vmem [shape: f32[8,1,1], index: 0, kind: input, shape index: {}]
  %s1 = inlined_call_operand.vmem [shape: f32[8,1,1], index: 1, kind: input, shape index: {}]
  %s2 = inlined_call_operand.hbm [shape: f32[8,16,16], index: 2, kind: input, shape index: {}]
  %s3 = inlined_call_operand.vmem [shape: f32[8,18,18], index: 3, kind: output, shape index: {}]
  %s4 = sld [smem:[#allocation0]]
  $region49: #{tpu_custom_call.1} parent=0
    _
  %s6 = ssub.s32 1, %s4
  %s7 = scalar_select 0, %s6, %s4
  $region1: #{tpu_custom_call.1} parent=0
    #allocation2 [shape = 'u8[65536]{0}', space=vmem, size = 0x10000, scoped, tag = 'input window, operand 2']
    #allocation3 [shape = 's32[2]{0}', space=sflag, size = 0x8, scoped, tag = 'scoped memory for tpu_custom_call.1']
    %8 = vsyncpa [#allocation3], 0
    %s9 = scalar_lea.sflag [#allocation3], 1
    %10 = vsyncpa %s9, 0
    loop: start=0, step=1, limit=4
    $region2: #{tpu_custom_call.1} parent=1 // loop_pre_header
      _
    $region3: #{tpu_custom_call.1} parent=1 // loop_header
      %s12 = sphi 0, %s16
      %p13 = scmp.ge.s32.totalorder %s12, 4
      %s22 = sphi 0, %s24
      %s25 = sphi 0, %s22
      %s26 = sphi 0, %s25
      %s42 = sphi 0, %s26
      %s48 = sphi 0, %s50
      %s51 = sphi 0, %s48
      %s52 = sphi 0, %s51
      %s68 = sphi 0, %s52
      %s74 = sphi 0, %s76
      %s77 = sphi 0, %s74
      %s78 = sphi 0, %s77
      %s94 = sphi 0, %s78
      %s100 = sphi 0, %s102
      %s103 = sphi 0, %s100
      %s104 = sphi 0, %s103
      %s120 = sphi 0, %s104
    $region4: #{tpu_custom_call.1} parent=1 // loop_header_branch
      %15 = sbr.rel (%p13) target = $region8
    $region5: #{tpu_custom_call.1} parent=1 // loop_body
      %s17 = ssub.s32 %s12, 1
      %s18 = ssub.s32 %s12, 2
      %s19 = sadd.s32 %s12, 1
      %s20 = ssub.s32 %s12, %s19
      %p21 = scmp.eq.s32.totalorder %s20, 0
      %s23 = sadd.s32 %s22, 1
      %s24 = scalar_select %p21, %s22, %s23
      %p27 = pneg %p21
      %p28 = scmp.eq.s32.totalorder %s12, 1
      %p29 = por %p27, %p28
      %p30 = scmp.ne.s32.totalorder %s22, %s25
      %p31 = scmp.eq.s32.totalorder %s12, 0
      %p32 = por %p30, %p31
      %p33 = scmp.ne.s32.totalorder %s22, %s25
      %p34 = scmp.eq.s32.totalorder %s17, 1
      %p35 = por %p33, %p34
      %p36 = scmp.ne.s32.totalorder %s25, %s26
      %p37 = scmp.eq.s32.totalorder %s17, 0
      %p38 = por %p36, %p37
      %p39 = scmp.ne.s32.totalorder %s25, %s26
      %p40 = scmp.eq.s32.totalorder %s18, 1
      %p41 = por %p39, %p40
      %p43 = scmp.ne.s32.totalorder %s26, %s42
      %p44 = scmp.eq.s32.totalorder %s18, 0
      %p45 = por %p43, %p44
      %s46 = ssub.s32 %s12, %s19
      %p47 = scmp.eq.s32.totalorder %s46, 0
      %s49 = sadd.s32 %s48, 1
      %s50 = scalar_select %p47, %s48, %s49
      %p53 = pneg %p47
      %p54 = scmp.eq.s32.totalorder %s12, 1
      %p55 = por %p53, %p54
      %p56 = scmp.ne.s32.totalorder %s48, %s51
      %p57 = scmp.eq.s32.totalorder %s12, 0
      %p58 = por %p56, %p57
      %p59 = scmp.ne.s32.totalorder %s48, %s51
      %p60 = scmp.eq.s32.totalorder %s17, 1
      %p61 = por %p59, %p60
      %p62 = scmp.ne.s32.totalorder %s51, %s52
      %p63 = scmp.eq.s32.totalorder %s17, 0
      %p64 = por %p62, %p63
      %p65 = scmp.ne.s32.totalorder %s51, %s52
      %p66 = scmp.eq.s32.totalorder %s18, 1
      %p67 = por %p65, %p66
      %p69 = scmp.ne.s32.totalorder %s52, %s68
      %p70 = scmp.eq.s32.totalorder %s18, 0
      %p71 = por %p69, %p70
      %s72 = ssub.s32 %s12, %s19
      %p73 = scmp.eq.s32.totalorder %s72, 0
      %s75 = sadd.s32 %s74, 1
      %s76 = scalar_select %p73, %s74, %s75
      %p79 = pneg %p73
      %p80 = scmp.eq.s32.totalorder %s12, 1
      %p81 = por %p79, %p80
      %p82 = scmp.ne.s32.totalorder %s74, %s77
      %p83 = scmp.eq.s32.totalorder %s12, 0
      %p84 = por %p82, %p83
      %p85 = scmp.ne.s32.totalorder %s74, %s77
      %p86 = scmp.eq.s32.totalorder %s17, 1
      %p87 = por %p85, %p86
      %p88 = scmp.ne.s32.totalorder %s77, %s78
      %p89 = scmp.eq.s32.totalorder %s17, 0
      %p90 = por %p88, %p89
      %p91 = scmp.ne.s32.totalorder %s77, %s78
      %p92 = scmp.eq.s32.totalorder %s18, 1
      %p93 = por %p91, %p92
      %p95 = scmp.ne.s32.totalorder %s78, %s94
      %p96 = scmp.eq.s32.totalorder %s18, 0
      %p97 = por %p95, %p96
      %s98 = ssub.s32 %s12, %s19
      %p99 = scmp.eq.s32.totalorder %s98, 0
      %s101 = sadd.s32 %s100, 1
      %s102 = scalar_select %p99, %s100, %s101
      %p105 = pneg %p99
      %p106 = scmp.eq.s32.totalorder %s12, 1
      %p107 = por %p105, %p106
      %p108 = scmp.ne.s32.totalorder %s100, %s103
      %p109 = scmp.eq.s32.totalorder %s12, 0
      %p110 = por %p108, %p109
      %p111 = scmp.ne.s32.totalorder %s100, %s103
      %p112 = scmp.eq.s32.totalorder %s17, 1
      %p113 = por %p111, %p112
      %p114 = scmp.ne.s32.totalorder %s103, %s104
      %p115 = scmp.eq.s32.totalorder %s17, 0
      %p116 = por %p114, %p115
      %p117 = scmp.ne.s32.totalorder %s103, %s104
      %p118 = scmp.eq.s32.totalorder %s18, 1
      %p119 = por %p117, %p118
      %p121 = scmp.ne.s32.totalorder %s104, %s120
      %p122 = scmp.eq.s32.totalorder %s18, 0
      %p123 = por %p121, %p122
      %p124 = scmp.le.s32.totalorder 1, %s12
      %p125 = scmp.lt.s32.totalorder %s12, 3
      %p126 = pnand %p124, %p125
      %p127 = pneg %p126
      // Predicated region
      $region9: #{tpu_custom_call.1} parent=5 // pred_check
        _
      $region10: #{tpu_custom_call.1} parent=5 // pred_check_branch
        %129 = sbr.rel (%p126) target = $region12
      $region11: #{tpu_custom_call.1} parent=5 // pred_region
        %s130 = ssub.s32 %s12, 1
      $region12: #{tpu_custom_call.1} parent=5 // pred_fallthru
        _
      %p131 = scmp.lt.s32.totalorder %s12, 2
      // Predicated region
      $region13: #{tpu_custom_call.1} parent=5 // pred_check
        %p132 = pneg %p131
      $region14: #{tpu_custom_call.1} parent=5 // pred_check_branch
        %134 = sbr.rel (%p132) target = $region16
      $region15: #{tpu_custom_call.1} parent=5 // pred_region
        // Predicated region
        $region17: #{tpu_custom_call.1} parent=15 // pred_check
          %p135 = pneg %p32
        $region18: #{tpu_custom_call.1} parent=15 // pred_check_branch
          %137 = sbr.rel (%p135) target = $region20
        $region19: #{tpu_custom_call.1} parent=15 // pred_region
          %s138 = smul.u32 4, %s12
          %p139 = scmp.lt.s32.totalorder %s138, 7
          %s140 = scalar_select %p139, %s138, 7
          %s141 = scalar_lea.vmem %s0, %s140
          %s142 = smul.u32 4, %s12
        $region20: #{tpu_custom_call.1} parent=15 // pred_fallthru
          _
        // Predicated region
        $region21: #{tpu_custom_call.1} parent=15 // pred_check
          %p143 = pneg %p58
        $region22: #{tpu_custom_call.1} parent=15 // pred_check_branch
          %145 = sbr.rel (%p143) target = $region24
        $region23: #{tpu_custom_call.1} parent=15 // pred_region
          %s146 = smul.u32 4, %s12
          %p147 = scmp.lt.s32.totalorder %s146, 7
          %s148 = scalar_select %p147, %s146, 7
          %s149 = scalar_lea.vmem %s1, %s148
          %s150 = smul.u32 4, %s12
        $region24: #{tpu_custom_call.1} parent=15 // pred_fallthru
          _
        // Predicated region
        $region25: #{tpu_custom_call.1} parent=15 // pred_check
          %p151 = pneg %p84
        $region26: #{tpu_custom_call.1} parent=15 // pred_check_branch
          %153 = sbr.rel (%p151) target = $region28
        $region27: #{tpu_custom_call.1} parent=15 // pred_region
          %s154 = sand.u32 %s74, 1
          %s155 = scalar_lea.sflag [#allocation3], %s154
          %s156 = sand.u32 %s74, 1
          %s157 = smul.addr %s156, 64
          %s158 = scalar_lea.vmem [#allocation2], %s157
          %s159 = smul.u32 4, %s12
          %161 = vsyncadd %s155, 0
          %s162 = smul.addr %s159, 2
          %s163 = smul.addr %s162, 8
          %s164 = scalar_lea.hbm %s2, %s163
          %s165 = sshll.u32 %s164, 4
          %s166 = int_to_ptr.hbm [resolvable:$true] %s165
          %s167 = sshll.u32 %s158, 4
          %s168 = int_to_ptr.vmem [resolvable:$true] %s167
          %173 = dma.hbm_to_vmem [thread:$0]  %s166, 1024, %s168, %s155, 128, 128, 8
        $region28: #{tpu_custom_call.1} parent=15 // pred_fallthru
          _
      $region16: #{tpu_custom_call.1} parent=5 // pred_fallthru
        _
      %p174 = scmp.le.s32.totalorder 1, %s12
      %p175 = scmp.lt.s32.totalorder %s12, 3
      %p176 = pnand %p174, %p175
      %p177 = pneg %p176
      // Predicated region
      $region29: #{tpu_custom_call.1} parent=5 // pred_check
        _
      $region30: #{tpu_custom_call.1} parent=5 // pred_check_branch
        %179 = sbr.rel (%p176) target = $region32
      $region31: #{tpu_custom_call.1} parent=5 // pred_region
        %s180 = ssub.s32 %s12, 1
        %s181 = sand.u32 %s77, 1
        %s182 = scalar_lea.sflag [#allocation3], %s181
        %s183 = sand.u32 %s77, 1
        %s184 = smul.addr %s183, 64
        %s185 = scalar_lea.vmem [#allocation2], %s184
        // Predicated region
        $region33: #{tpu_custom_call.1} parent=31 // pred_check
          %p186 = pneg %p90
        $region34: #{tpu_custom_call.1} parent=31 // pred_check_branch
          %188 = sbr.rel (%p186) target = $region36
        $region35: #{tpu_custom_call.1} parent=31 // pred_region
          %190 = dma.done %s182, 1024
        $region36: #{tpu_custom_call.1} parent=31 // pred_fallthru
          _
        %s191 = smul.u32 4, %s17
        %p192 = scmp.lt.s32.totalorder %s191, 7
        %s193 = scalar_select %p192, %s191, 7
        %s194 = scalar_lea.vmem %s0, %s193
        %p195 = pneg %p38
        %p196 = pneg %p35
        %s197 = smul.u32 4, %s17
        %p198 = scmp.lt.s32.totalorder %s197, 7
        %s199 = scalar_select %p198, %s197, 7
        %s200 = scalar_lea.vmem %s1, %s199
        %p201 = pneg %p64
        %p202 = pneg %p61
        %s203 = sand.u32 %s77, 1
        %s204 = scalar_lea.sflag [#allocation3], %s203
        %s205 = sand.u32 %s77, 1
        %s206 = smul.addr %s205, 64
        %s207 = scalar_lea.vmem [#allocation2], %s206
        %p208 = pneg %p90
        %p209 = pneg %p87
        %p210 = pneg %p116
        %p211 = pneg %p113
        %s212 = smul.u32 4, %s17
        %p213 = scmp.lt.s32.totalorder %s212, 7
        %s214 = scalar_select %p213, %s212, 7
        %s215 = smul.addr %s214, 3
        %s216 = smul.addr %s215, 8
        %s217 = scalar_lea.vmem %s3, %s216
        %s218 = smul.u32 4, %s17
        %p219 = scmp.lt.s32.totalorder %s218, 7
        %s220 = scalar_select %p219, %s218, 7
        %s221 = scalar_lea.vmem %s0, %s220
        %s222 = smul.u32 4, %s17
        %s223 = smul.u32 4, %s17
        %p224 = scmp.lt.s32.totalorder %s223, 7
        %s225 = scalar_select %p224, %s223, 7
        %s226 = scalar_lea.vmem %s1, %s225
        %s227 = smul.u32 4, %s17
        %s228 = smul.u32 4, %s17
        %s229 = smul.u32 4, %s17
        %p230 = scmp.lt.s32.totalorder %s229, 7
        %s231 = scalar_select %p230, %s229, 7
        %s232 = smul.addr %s231, 3
        %s233 = smul.addr %s232, 8
        %s234 = scalar_lea.vmem %s3, %s233
        %s235 = smul.u32 4, %s17
        %v236 = vld [vmem:[%s221] sm:$0x1]
        %v237 = vld [vmem:[%s221 + $0x1] sm:$0x1]
        %v238 = vld [vmem:[%s221 + $0x2] sm:$0x1]
        %v239 = vld [vmem:[%s221 + $0x3] sm:$0x1]
        %v240 = vld [vmem:[%s226] sm:$0x1]
        %v241 = vld [vmem:[%s226 + $0x1] sm:$0x1]
        %v242 = vld [vmem:[%s226 + $0x2] sm:$0x1]
        %v243 = vld [vmem:[%s226 + $0x3] sm:$0x1]
        %v244 = vld [vmem:[%s185] sm:$0xff]
        %v245 = vld [vmem:[%s185 + $0x8] sm:$0xff]
        %v246 = vld [vmem:[%s185 + $0x10] sm:$0xff]
        %v247 = vld [vmem:[%s185 + $0x18] sm:$0xff]
        %v248 = vld [vmem:[%s185 + $0x20] sm:$0xff]
        %v249 = vld [vmem:[%s185 + $0x28] sm:$0xff]
        %v250 = vld [vmem:[%s185 + $0x30] sm:$0xff]
        %v251 = vld [vmem:[%s185 + $0x38] sm:$0xff]
        %v256 = vperm.slane %v236, 0
        %v257 = vperm.slane %v237, 0
        %v258 = vperm.slane %v238, 0
        %v259 = vperm.slane %v239, 0
        %260 = vset.pattern.permute.xlu0 0
        %261 = vperm.xlu0 %260, %v256
        %v262 = vpop.permute.xlu0 %261
        %264 = vset.pattern.permute.xlu0 0
        %265 = vperm.xlu0 %264, %v257
        %v266 = vpop.permute.xlu0 %265
        %268 = vset.pattern.permute.xlu0 0
        %269 = vperm.xlu0 %268, %v258
        %v270 = vpop.permute.xlu0 %269
        %272 = vset.pattern.permute.xlu0 0
        %273 = vperm.xlu0 %272, %v259
        %v274 = vpop.permute.xlu0 %273
        %v276 = vmul.f32 %v244, %v262
        %v277 = vmul.f32 %v245, %v262
        %v278 = vmul.f32 %v246, %v266
        %v279 = vmul.f32 %v247, %v266
        %v280 = vmul.f32 %v248, %v270
        %v281 = vmul.f32 %v249, %v270
        %v282 = vmul.f32 %v250, %v274
        %v283 = vmul.f32 %v251, %v274
        %v288 = vperm.slane %v240, 0
        %v289 = vperm.slane %v241, 0
        %v290 = vperm.slane %v242, 0
        %v291 = vperm.slane %v243, 0
        %292 = vset.pattern.permute.xlu0 0
        %293 = vperm.xlu0 %292, %v288
        %v294 = vpop.permute.xlu0 %293
        %296 = vset.pattern.permute.xlu0 0
        %297 = vperm.xlu0 %296, %v289
        %v298 = vpop.permute.xlu0 %297
        %300 = vset.pattern.permute.xlu0 0
        %301 = vperm.xlu0 %300, %v290
        %v302 = vpop.permute.xlu0 %301
        %304 = vset.pattern.permute.xlu0 0
        %305 = vperm.xlu0 %304, %v291
        %v306 = vpop.permute.xlu0 %305
        %v308 = vadd.f32 %v276, %v294
        %v309 = vadd.f32 %v277, %v294
        %v310 = vadd.f32 %v278, %v298
        %v311 = vadd.f32 %v279, %v298
        %v312 = vadd.f32 %v280, %v302
        %v313 = vadd.f32 %v281, %v302
        %v314 = vadd.f32 %v282, %v306
        %v315 = vadd.f32 %v283, %v306
        %vm316 = vcmask 146432
        %317 = vst.msk [vmem:[%s234] sm:$0xff] %vm316, %v294
        %318 = vst.msk [vmem:[%s234 + $0x8] sm:$0xff] %vm316, %v294
        %vm319 = vcmask 140288
        %320 = vst.msk [vmem:[%s234 + $0x10] sm:$0x3] %vm319, %v294
        %321 = vst.msk [vmem:[%s234 + $0x18] sm:$0xff] %vm316, %v298
        %322 = vst.msk [vmem:[%s234 + $0x20] sm:$0xff] %vm316, %v298
        %323 = vst.msk [vmem:[%s234 + $0x28] sm:$0x3] %vm319, %v298
        %324 = vst.msk [vmem:[%s234 + $0x30] sm:$0xff] %vm316, %v302
        %325 = vst.msk [vmem:[%s234 + $0x38] sm:$0xff] %vm316, %v302
        %326 = vst.msk [vmem:[%s234 + $0x40] sm:$0x3] %vm319, %v302
        %327 = vst.msk [vmem:[%s234 + $0x48] sm:$0xff] %vm316, %v306
        %328 = vst.msk [vmem:[%s234 + $0x50] sm:$0xff] %vm316, %v306
        %329 = vst.msk [vmem:[%s234 + $0x58] sm:$0x3] %vm319, %v306
        %338 = vrot.lane.b32.xlu0 %v308, 1
        %v339 = vpop.permute.xlu0 %338
        %340 = vrot.lane.b32.xlu0 %v309, 1
        %v341 = vpop.permute.xlu0 %340
        %342 = vrot.lane.b32.xlu0 %v310, 1
        %v343 = vpop.permute.xlu0 %342
        %344 = vrot.lane.b32.xlu0 %v311, 1
        %v345 = vpop.permute.xlu0 %344
        %346 = vrot.lane.b32.xlu0 %v312, 1
        %v347 = vpop.permute.xlu0 %346
        %348 = vrot.lane.b32.xlu0 %v313, 1
        %v349 = vpop.permute.xlu0 %348
        %350 = vrot.lane.b32.xlu0 %v314, 1
        %v351 = vpop.permute.xlu0 %350
        %352 = vrot.lane.b32.xlu0 %v315, 1
        %v353 = vpop.permute.xlu0 %352
        %vm362 = vcmask 138248
        %363 = vst.msk [vmem:[%s234 + $0x1] sm:$0xff] %vm362, %v339
        %364 = vst.msk [vmem:[%s234 + $0x9] sm:$0xff] %vm362, %v341
        %365 = vst.msk [vmem:[%s234 + $0x19] sm:$0xff] %vm362, %v343
        %366 = vst.msk [vmem:[%s234 + $0x21] sm:$0xff] %vm362, %v345
        %367 = vst.msk [vmem:[%s234 + $0x31] sm:$0xff] %vm362, %v347
        %368 = vst.msk [vmem:[%s234 + $0x39] sm:$0xff] %vm362, %v349
        %369 = vst.msk [vmem:[%s234 + $0x49] sm:$0xff] %vm362, %v351
        %370 = vst.msk [vmem:[%s234 + $0x51] sm:$0xff] %vm362, %v353
        %s371 = smul.u32 4, %s17
        %p372 = scmp.lt.s32.totalorder %s371, 7
        %s373 = scalar_select %p372, %s371, 7
        %s374 = smul.addr %s373, 3
        %s375 = smul.addr %s374, 8
        %s376 = scalar_lea.vmem %s3, %s375
        // Predicated region
        $region37: #{tpu_custom_call.1} parent=31 // pred_check
          %p377 = pneg %p113
        $region38: #{tpu_custom_call.1} parent=31 // pred_check_branch
          %379 = sbr.rel (%p377) target = $region40
        $region39: #{tpu_custom_call.1} parent=31 // pred_region
          %s380 = smul.u32 4, %s17
        $region40: #{tpu_custom_call.1} parent=31 // pred_fallthru
          _
      $region32: #{tpu_custom_call.1} parent=5 // pred_fallthru
        _
      %p381 = scmp.le.s32.totalorder 2, %s12
      // Predicated region
      $region41: #{tpu_custom_call.1} parent=5 // pred_check
        %p382 = pneg %p381
      $region42: #{tpu_custom_call.1} parent=5 // pred_check_branch
        %384 = sbr.rel (%p382) target = $region44
      $region43: #{tpu_custom_call.1} parent=5 // pred_region
        %s385 = ssub.s32 %s12, 2
        // Predicated region
        $region45: #{tpu_custom_call.1} parent=43 // pred_check
          %p386 = pneg %p119
        $region46: #{tpu_custom_call.1} parent=43 // pred_check_branch
          %388 = sbr.rel (%p386) target = $region48
        $region47: #{tpu_custom_call.1} parent=43 // pred_region
          %s389 = smul.u32 4, %s18
          %p390 = scmp.lt.s32.totalorder %s389, 7
          %s391 = scalar_select %p390, %s389, 7
          %s392 = smul.addr %s391, 3
          %s393 = smul.addr %s392, 8
          %s394 = scalar_lea.vmem %s3, %s393
        $region48: #{tpu_custom_call.1} parent=43 // pred_fallthru
          _
      $region44: #{tpu_custom_call.1} parent=5 // pred_fallthru
        _
    $region6: #{tpu_custom_call.1} parent=1 // loop_footer
      %s16 = sadd.s32 1, %s12
    $region7: #{tpu_custom_call.1} parent=1 // loop_footer_branch
      %11 = sbr.rel target = $region3
    $region8: #{tpu_custom_call.1} parent=1 // loop_exit
      _
    %395 = vsyncpa [#allocation3], 1
    %s396 = scalar_lea.sflag [#allocation3], 1
    %397 = vsyncpa %s396, 1

</llo_original>
